<compile_context>
chip_gen: v7x
topology: tpu7x:2x2x1
jax: 0.10.0
libtpu: 0.0.40
codegen_flags: <defaults>
</compile_context>

<pallas_src>
import jax
import jax.numpy as jnp
from jax import lax
from jax.experimental import pallas as pl
from jax.experimental.pallas import tpu as pltpu


def _codebook_kernel(x_ref, wt_ref, w_ref, zq_ref, probs_ref):
    x = x_ref[...].astype(jnp.float32)       # (TN, D)
    wt = wt_ref[...].astype(jnp.float32)     # (D, K)  codes along lanes

    tn, d = x.shape
    _, k = wt.shape

    # ||x - w||^2 unrolled over the tiny latent dim: VPU only, numerically exact.
    diff = x[:, 0:1] - wt[0:1, :]                      # (TN, K)
    dist = diff * diff
    for j in range(1, d):
        diff = x[:, j:j + 1] - wt[j:j + 1, :]
        dist = dist + diff * diff

    iota_k = lax.broadcasted_iota(jnp.int32, (tn, k), 1)

    # argmin(dim=1) with torch semantics (first occurrence wins on ties).
    # Both operands of the equality come from the same `dist` tensor, so exact
    # float equality is safe.
    min_val = jnp.min(dist, axis=1, keepdims=True)     # (TN, 1)
    masked = jnp.where(dist == min_val, iota_k, k)     # non-min -> K
    idx = jnp.min(masked, axis=1, keepdims=True)       # (TN, 1) int32

    # probs = one-hot scatter of codebook_indices.
    one_hot = (iota_k == idx).astype(jnp.float32)      # (TN, K)
    probs_ref[...] = one_hot.astype(probs_ref.dtype)

    # z_q = embedding(codebook_indices) == one_hot @ W.  Uses the untransposed
    # (K, D) codebook so the MXU sees a natural (M,K)x(K,N) contraction and no
    # per-step weight transpose is emitted.
    w = w_ref[...].astype(jnp.float32)                 # (K, D)
    zq = lax.dot_general(
        one_hot, w,
        dimension_numbers=(((1,), (0,)), ((), ())),
        preferred_element_type=jnp.float32)            # (TN, D)
    zq_ref[...] = zq.astype(zq_ref.dtype)


def _round_up(x, m):
    return ((x + m - 1) // m) * m


def cvqvae_codebook(x, embedding_weight, *, block_rows=2048, min_steps=4,
                    probs_dtype=jnp.float32):
    """x: (N, latent_dim), embedding_weight: (num_embeddings, latent_dim).

    Returns (z_q: (N, latent_dim) f32, probs: (N, num_embeddings) probs_dtype).
    """
    n, d = x.shape
    k, d2 = embedding_weight.shape
    assert d == d2

    # Row tile: multiple of 8 sublanes, big enough to amortize the ~0.35 us
    # per-step pipeline overhead, small enough that (a) the grid has at least
    # `min_steps` steps (v7x megacore sharding) and (b) the double-buffered
    # probs blocks + (TN, K) temporaries stay within the 48 MiB VMEM budget.
    block_rows = max(8, (int(block_rows) // 8) * 8)
    n8 = _round_up(n, 8)
    tn = min(block_rows, n8)
    if n8 >= 8 * min_steps:
        tn = min(tn, _round_up(pl.cdiv(n8, min_steps), 8))
    tn = max(tn, 8)
    grid = (pl.cdiv(n, tn),)

    # Tiny one-time transpose in XLA: lane-dense (D, K) codebook for the VPU
    # distance; the original (K, D) codebook rides along for the z_q matmul.
    wt = embedding_weight.T
    w = embedding_weight

    probs_bytes = n * k * jnp.dtype(probs_dtype).itemsize
    cost = pl.CostEstimate(
        flops=n * k * (5 * d + 6),
        transcendentals=0,
        bytes_accessed=(n * d + 2 * d * k + n * d) * 4 + probs_bytes,
    )

    zq, probs = pl.pallas_call(
        _codebook_kernel,
        out_shape=(
            jax.ShapeDtypeStruct((n, d), jnp.float32),
            jax.ShapeDtypeStruct((n, k), probs_dtype),
        ),
        grid=grid,
        in_specs=[
            pl.BlockSpec((tn, d), lambda i: (i, 0)),   # x tile
            pl.BlockSpec((d, k), lambda i: (0, 0)),    # codebook^T, resident
            pl.BlockSpec((k, d), lambda i: (0, 0)),    # codebook,   resident
        ],
        out_specs=(
            pl.BlockSpec((tn, d), lambda i: (i, 0)),   # z_q tile
            pl.BlockSpec((tn, k), lambda i: (i, 0)),   # probs tile
        ),
        compiler_params=pltpu.CompilerParams(
            dimension_semantics=("parallel",),
            vmem_limit_bytes=48 * 1024 * 1024,
        ),
        cost_estimate=cost,
    )(x, wt, w)
    return zq, probs


def _reference(x, w):
    # Same expanded formula as the PyTorch module (the spec).
    dist = (jnp.sum(x ** 2, axis=1, keepdims=True)
            + jnp.sum(w ** 2, axis=1)
            - 2.0 * x @ w.T)
    idx = jnp.argmin(dist, axis=1)
    probs = jax.nn.one_hot(idx, w.shape[0], dtype=jnp.float32)
    z_q = w[idx]
    return z_q, probs


if __name__ == "__main__":
    num_embeddings = 320
    latent_dim = 3
    batch = 64          # small, but enough rows to exercise a multi-step grid

    key = jax.random.PRNGKey(0)
    kx, kw = jax.random.split(key)

    x = jax.random.normal(kx, (batch, latent_dim), dtype=jnp.float32)
    # NOTE: the PyTorch init uniform_(-1/K, -1/K) is a degenerate constant;
    # we use a deterministic uniform in [-1/K, 1/K] so argmin is non-trivial.
    embedding_weight = jax.random.uniform(
        kw, (num_embeddings, latent_dim), dtype=jnp.float32,
        minval=-1.0 / num_embeddings, maxval=1.0 / num_embeddings)

    z_ref, p_ref = _reference(x, embedding_weight)

    # Explicit small tile -> 4-step grid: exercises tiling + resident codebook.
    z_q, probs = cvqvae_codebook(x, embedding_weight, block_rows=16)
    jax.block_until_ready((z_q, probs))
    assert z_q.shape == (batch, latent_dim)
    assert probs.shape == (batch, num_embeddings)
    assert jnp.allclose(z_q, z_ref, atol=1e-5)
    assert jnp.allclose(probs, p_ref)

    # Default tiling path: min-steps guard picks the tile automatically.
    z_q2, probs2 = cvqvae_codebook(x, embedding_weight)
    jax.block_until_ready((z_q2, probs2))
    assert jnp.allclose(z_q2, z_ref, atol=1e-5)
    assert jnp.allclose(probs2, p_ref)

    print("KERNEL_OK")
</pallas_src>

<mosaic_0001>
module attributes {stable_mosaic.version = 11 : i64} {
  func.func @_codebook_kernel(%arg0: i32, %arg1: memref<16x3xf32, #tpu.memory_space<vmem>>, %arg2: memref<3x320xf32, #tpu.memory_space<vmem>>, %arg3: memref<320x3xf32, #tpu.memory_space<vmem>>, %arg4: memref<16x3xf32, #tpu.memory_space<vmem>>, %arg5: memref<16x320xf32, #tpu.memory_space<vmem>>) attributes {dimension_semantics = [#tpu.dimension_semantics<parallel>], iteration_bounds = array<i64: 4>, scalar_prefetch = 0 : i64, scratch_operands = 0 : i64, tpu.core_type = #tpu.core_type<tc>, window_params = [{transform_indices = @transform_0, window_bounds = array<i64: 16, 3>}, {pipeline_mode = #tpu.pipeline_mode<synchronous>, transform_indices = @transform_1, window_bounds = array<i64: 3, 320>}, {pipeline_mode = #tpu.pipeline_mode<synchronous>, transform_indices = @transform_2, window_bounds = array<i64: 320, 3>}, {transform_indices = @transform_3, window_bounds = array<i64: 16, 3>}, {transform_indices = @transform_4, window_bounds = array<i64: 16, 320>}]} {
    %c0 = arith.constant 0 : index
    %c0_0 = arith.constant 0 : index
    %0 = vector.load %arg1[%c0, %c0_0] : memref<16x3xf32, #tpu.memory_space<vmem>>, vector<16x3xf32>
    %c0_1 = arith.constant 0 : index
    %c0_2 = arith.constant 0 : index
    %1 = vector.load %arg2[%c0_1, %c0_2] : memref<3x320xf32, #tpu.memory_space<vmem>>, vector<3x320xf32>
    %2 = vector.extract_strided_slice %0 {offsets = [0, 0], sizes = [16, 1], strides = [1, 1]} : vector<16x3xf32> to vector<16x1xf32>
    %3 = vector.extract_strided_slice %1 {offsets = [0, 0], sizes = [1, 320], strides = [1, 1]} : vector<3x320xf32> to vector<1x320xf32>
    %4 = vector.broadcast %2 : vector<16x1xf32> to vector<16x320xf32>
    %5 = vector.broadcast %3 : vector<1x320xf32> to vector<16x320xf32>
    %6 = arith.subf %4, %5 : vector<16x320xf32>
    %7 = arith.mulf %6, %6 : vector<16x320xf32>
    %8 = vector.extract_strided_slice %0 {offsets = [0, 1], sizes = [16, 1], strides = [1, 1]} : vector<16x3xf32> to vector<16x1xf32>
    %9 = vector.extract_strided_slice %1 {offsets = [1, 0], sizes = [1, 320], strides = [1, 1]} : vector<3x320xf32> to vector<1x320xf32>
    %10 = vector.broadcast %8 : vector<16x1xf32> to vector<16x320xf32>
    %11 = vector.broadcast %9 : vector<1x320xf32> to vector<16x320xf32>
    %12 = arith.subf %10, %11 : vector<16x320xf32>
    %13 = arith.mulf %12, %12 : vector<16x320xf32>
    %14 = arith.addf %7, %13 : vector<16x320xf32>
    %15 = vector.extract_strided_slice %0 {offsets = [0, 2], sizes = [16, 1], strides = [1, 1]} : vector<16x3xf32> to vector<16x1xf32>
    %16 = vector.extract_strided_slice %1 {offsets = [2, 0], sizes = [1, 320], strides = [1, 1]} : vector<3x320xf32> to vector<1x320xf32>
    %17 = vector.broadcast %15 : vector<16x1xf32> to vector<16x320xf32>
    %18 = vector.broadcast %16 : vector<1x320xf32> to vector<16x320xf32>
    %19 = arith.subf %17, %18 : vector<16x320xf32>
    %20 = arith.mulf %19, %19 : vector<16x320xf32>
    %21 = arith.addf %14, %20 : vector<16x320xf32>
    %22 = tpu.iota {dimensions = array<i32: 1>} : vector<16x320xi32>
    %cst = arith.constant dense<0x7F800000> : vector<16xf32>
    %23 = vector.multi_reduction <minimumf>, %21, %cst [1] : vector<16x320xf32> to vector<16xf32>
    %24 = vector.shape_cast %23 : vector<16xf32> to vector<16x1xf32>
    %25 = vector.broadcast %24 : vector<16x1xf32> to vector<16x320xf32>
    %26 = arith.cmpf oeq, %21, %25 : vector<16x320xf32>
    %c320_i32 = arith.constant 320 : i32
    %27 = vector.broadcast %c320_i32 : i32 to vector<16x320xi32>
    %28 = arith.select %26, %22, %27 : vector<16x320xi1>, vector<16x320xi32>
    %cst_3 = arith.constant dense<2147483647> : vector<16xi32>
    %29 = vector.multi_reduction <minsi>, %28, %cst_3 [1] : vector<16x320xi32> to vector<16xi32>
    %30 = vector.shape_cast %29 : vector<16xi32> to vector<16x1xi32>
    %31 = vector.broadcast %30 : vector<16x1xi32> to vector<16x320xi32>
    %32 = arith.cmpi eq, %22, %31 : vector<16x320xi32>
    %33 = arith.extui %32 : vector<16x320xi1> to vector<16x320xi32>
    %34 = arith.sitofp %33 : vector<16x320xi32> to vector<16x320xf32>
    %c0_4 = arith.constant 0 : index
    %c0_5 = arith.constant 0 : index
    %35 = vector.load %arg5[%c0_4, %c0_5] : memref<16x320xf32, #tpu.memory_space<vmem>>, vector<16x320xf32>
    tpu.vector_store %arg5[%c0_4, %c0_5], %34 {strides = array<i32>} : memref<16x320xf32, #tpu.memory_space<vmem>>, vector<16x320xf32>,
    %c0_6 = arith.constant 0 : index
    %c0_7 = arith.constant 0 : index
    %36 = vector.load %arg3[%c0_6, %c0_7] : memref<320x3xf32, #tpu.memory_space<vmem>>, vector<320x3xf32>
    %cst_8 = arith.constant dense<0.000000e+00> : vector<16x3xf32>
    %37 = tpu.matmul %34, %36, %cst_8 {dimension_numbers = #tpu.dot_dimension_numbers<[1], [0], [0], [1], [0, 0, 1, 1], [], []>} : vector<16x320xf32>, vector<320x3xf32>, vector<16x3xf32> -> vector<16x3xf32>
    %c0_9 = arith.constant 0 : index
    %c0_10 = arith.constant 0 : index
    %38 = vector.load %arg4[%c0_9, %c0_10] : memref<16x3xf32, #tpu.memory_space<vmem>>, vector<16x3xf32>
    tpu.vector_store %arg4[%c0_9, %c0_10], %37 {strides = array<i32>} : memref<16x3xf32, #tpu.memory_space<vmem>>, vector<16x3xf32>,
    return
  }
  func.func @transform_0(%arg0: i32) -> (i32, i32) {
    %c0_i32 = arith.constant 0 : i32
    %c0_i32_0 = arith.constant 0 : i32
    return %arg0, %c0_i32 : i32, i32
  }
  func.func @transform_1(%arg0: i32) -> (i32, i32) {
    %c0_i32 = arith.constant 0 : i32
    %c0_i32_0 = arith.constant 0 : i32
    %c0_i32_1 = arith.constant 0 : i32
    return %c0_i32, %c0_i32_0 : i32, i32
  }
  func.func @transform_2(%arg0: i32) -> (i32, i32) {
    %c0_i32 = arith.constant 0 : i32
    %c0_i32_0 = arith.constant 0 : i32
    %c0_i32_1 = arith.constant 0 : i32
    return %c0_i32, %c0_i32_0 : i32, i32
  }
  func.func @transform_3(%arg0: i32) -> (i32, i32) {
    %c0_i32 = arith.constant 0 : i32
    %c0_i32_0 = arith.constant 0 : i32
    return %arg0, %c0_i32 : i32, i32
  }
  func.func @transform_4(%arg0: i32) -> (i32, i32) {
    %c0_i32 = arith.constant 0 : i32
    %c0_i32_0 = arith.constant 0 : i32
    return %arg0, %c0_i32 : i32, i32
  }
}

</mosaic_0001>

<llo_original>
// kernel: tpu_custom_call.1
$region0: #{tpu_custom_call.1}
  #allocation0 [shape = 'u32[]', space=smem, size = 0x4, offset = 0x4, fixed_abs, tag = 'smem constant byte address 0x4 - core index']
  #allocation1 [shape = 'u32[144,128]{1,0:T(1,128)}', space=vmem, size = 0x12000, scoped, tag = 'internal scratch']
  %s0 = inlined_call_operand.vmem [shape: f32[64,3], index: 0, kind: input, shape index: {}]
  %s1 = inlined_call_operand.vmem [shape: f32[3,320], index: 1, kind: input, shape index: {}]
  %s2 = inlined_call_operand.vmem [shape: f32[320,3], index: 2, kind: input, shape index: {}]
  %s3 = inlined_call_operand.vmem [shape: f32[64,3], index: 3, kind: output, shape index: {0}]
  %s4 = inlined_call_operand.hbm [shape: f32[64,320], index: 4, kind: output, shape index: {1}]
  %5 = xla_tuple %s3, %s4
  %s6 = sld [smem:[#allocation0]]
  $region53: #{tpu_custom_call.1} parent=0
    _
  %s8 = ssub.s32 1, %s6
  %s9 = scalar_select 0, %s8, %s6
  $region1: #{tpu_custom_call.1} parent=0
    #allocation2 [shape = 'u8[49152]{0}', space=vmem, size = 0xc000, scoped, tag = 'output window, operand 1']
    #allocation3 [shape = 's32[2]{0}', space=sflag, size = 0x8, scoped, tag = 'scoped memory for tpu_custom_call.1']
    %10 = vsyncpa [#allocation3], 0
    %s11 = scalar_lea.sflag [#allocation3], 1
    %12 = vsyncpa %s11, 0
    loop: start=0, step=1, limit=6
    $region2: #{tpu_custom_call.1} parent=1 // loop_pre_header
      _
    $region3: #{tpu_custom_call.1} parent=1 // loop_header
      %s14 = sphi 0, %s18
      %p15 = scmp.ge.s32.totalorder %s14, 6
      %s24 = sphi 0, %s26
      %s27 = sphi 0, %s24
      %s28 = sphi 0, %s27
      %s44 = sphi 0, %s28
      %s48 = sphi 0, %s48
      %s50 = sphi 0, %s48
      %s51 = sphi 0, %s50
      %s65 = sphi 0, %s51
      %s69 = sphi 0, %s69
      %s71 = sphi 0, %s69
      %s72 = sphi 0, %s71
      %s86 = sphi 0, %s72
      %s92 = sphi 0, %s94
      %s95 = sphi 0, %s92
      %s96 = sphi 0, %s95
      %s112 = sphi 0, %s96
      %s118 = sphi 0, %s120
      %s121 = sphi 0, %s118
      %s122 = sphi 0, %s121
      %s138 = sphi 0, %s122
    $region4: #{tpu_custom_call.1} parent=1 // loop_header_branch
      %17 = sbr.rel (%p15) target = $region8
    $region5: #{tpu_custom_call.1} parent=1 // loop_body
      %s19 = ssub.s32 %s14, 1
      %s20 = ssub.s32 %s14, 2
      %s21 = sadd.s32 %s14, 1
      %s22 = ssub.s32 %s14, %s21
      %p23 = scmp.eq.s32.totalorder %s22, 0
      %s25 = sadd.s32 %s24, 1
      %s26 = scalar_select %p23, %s24, %s25
      %p29 = pneg %p23
      %p30 = scmp.eq.s32.totalorder %s14, 3
      %p31 = por %p29, %p30
      %p32 = scmp.ne.s32.totalorder %s24, %s27
      %p33 = scmp.eq.s32.totalorder %s14, 0
      %p34 = por %p32, %p33
      %p35 = scmp.ne.s32.totalorder %s24, %s27
      %p36 = scmp.eq.s32.totalorder %s19, 3
      %p37 = por %p35, %p36
      %p38 = scmp.ne.s32.totalorder %s27, %s28
      %p39 = scmp.eq.s32.totalorder %s19, 0
      %p40 = por %p38, %p39
      %p41 = scmp.ne.s32.totalorder %s27, %s28
      %p42 = scmp.eq.s32.totalorder %s20, 3
      %p43 = por %p41, %p42
      %p45 = scmp.ne.s32.totalorder %s28, %s44
      %p46 = scmp.eq.s32.totalorder %s20, 0
      %p47 = por %p45, %p46
      %s49 = sadd.s32 %s48, 1
      %p52 = scmp.eq.s32.totalorder %s14, 3
      %p53 = scmp.ne.s32.totalorder %s48, %s50
      %p54 = scmp.eq.s32.totalorder %s14, 0
      %p55 = por %p53, %p54
      %p56 = scmp.ne.s32.totalorder %s48, %s50
      %p57 = scmp.eq.s32.totalorder %s19, 3
      %p58 = por %p56, %p57
      %p59 = scmp.ne.s32.totalorder %s50, %s51
      %p60 = scmp.eq.s32.totalorder %s19, 0
      %p61 = por %p59, %p60
      %p62 = scmp.ne.s32.totalorder %s50, %s51
      %p63 = scmp.eq.s32.totalorder %s20, 3
      %p64 = por %p62, %p63
      %p66 = scmp.ne.s32.totalorder %s51, %s65
      %p67 = scmp.eq.s32.totalorder %s20, 0
      %p68 = por %p66, %p67
      %s70 = sadd.s32 %s69, 1
      %p73 = scmp.eq.s32.totalorder %s14, 3
      %p74 = scmp.ne.s32.totalorder %s69, %s71
      %p75 = scmp.eq.s32.totalorder %s14, 0
      %p76 = por %p74, %p75
      %p77 = scmp.ne.s32.totalorder %s69, %s71
      %p78 = scmp.eq.s32.totalorder %s19, 3
      %p79 = por %p77, %p78
      %p80 = scmp.ne.s32.totalorder %s71, %s72
      %p81 = scmp.eq.s32.totalorder %s19, 0
      %p82 = por %p80, %p81
      %p83 = scmp.ne.s32.totalorder %s71, %s72
      %p84 = scmp.eq.s32.totalorder %s20, 3
      %p85 = por %p83, %p84
      %p87 = scmp.ne.s32.totalorder %s72, %s86
      %p88 = scmp.eq.s32.totalorder %s20, 0
      %p89 = por %p87, %p88
      %s90 = ssub.s32 %s14, %s21
      %p91 = scmp.eq.s32.totalorder %s90, 0
      %s93 = sadd.s32 %s92, 1
      %s94 = scalar_select %p91, %s92, %s93
      %p97 = pneg %p91
      %p98 = scmp.eq.s32.totalorder %s14, 3
      %p99 = por %p97, %p98
      %p100 = scmp.ne.s32.totalorder %s92, %s95
      %p101 = scmp.eq.s32.totalorder %s14, 0
      %p102 = por %p100, %p101
      %p103 = scmp.ne.s32.totalorder %s92, %s95
      %p104 = scmp.eq.s32.totalorder %s19, 3
      %p105 = por %p103, %p104
      %p106 = scmp.ne.s32.totalorder %s95, %s96
      %p107 = scmp.eq.s32.totalorder %s19, 0
      %p108 = por %p106, %p107
      %p109 = scmp.ne.s32.totalorder %s95, %s96
      %p110 = scmp.eq.s32.totalorder %s20, 3
      %p111 = por %p109, %p110
      %p113 = scmp.ne.s32.totalorder %s96, %s112
      %p114 = scmp.eq.s32.totalorder %s20, 0
      %p115 = por %p113, %p114
      %s116 = ssub.s32 %s14, %s21
      %p117 = scmp.eq.s32.totalorder %s116, 0
      %s119 = sadd.s32 %s118, 1
      %s120 = scalar_select %p117, %s118, %s119
      %p123 = pneg %p117
      %p124 = scmp.eq.s32.totalorder %s14, 3
      %p125 = por %p123, %p124
      %p126 = scmp.ne.s32.totalorder %s118, %s121
      %p127 = scmp.eq.s32.totalorder %s14, 0
      %p128 = por %p126, %p127
      %p129 = scmp.ne.s32.totalorder %s118, %s121
      %p130 = scmp.eq.s32.totalorder %s19, 3
      %p131 = por %p129, %p130
      %p132 = scmp.ne.s32.totalorder %s121, %s122
      %p133 = scmp.eq.s32.totalorder %s19, 0
      %p134 = por %p132, %p133
      %p135 = scmp.ne.s32.totalorder %s121, %s122
      %p136 = scmp.eq.s32.totalorder %s20, 3
      %p137 = por %p135, %p136
      %p139 = scmp.ne.s32.totalorder %s122, %s138
      %p140 = scmp.eq.s32.totalorder %s20, 0
      %p141 = por %p139, %p140
      %p142 = scmp.le.s32.totalorder 1, %s14
      %p143 = scmp.lt.s32.totalorder %s14, 5
      %p144 = pnand %p142, %p143
      %p145 = pneg %p144
      // Predicated region
      $region9: #{tpu_custom_call.1} parent=5 // pred_check
        _
      $region10: #{tpu_custom_call.1} parent=5 // pred_check_branch
        %147 = sbr.rel (%p144) target = $region12
      $region11: #{tpu_custom_call.1} parent=5 // pred_region
        %s148 = ssub.s32 %s14, 1
        // Predicated region
        $region13: #{tpu_custom_call.1} parent=11 // pred_check
          %p149 = pneg %p61
        $region14: #{tpu_custom_call.1} parent=11 // pred_check_branch
          %151 = sbr.rel (%p149) target = $region16
        $region15: #{tpu_custom_call.1} parent=11 // pred_region
          _
        $region16: #{tpu_custom_call.1} parent=11 // pred_fallthru
          _
        // Predicated region
        $region17: #{tpu_custom_call.1} parent=11 // pred_check
          %p152 = pneg %p82
        $region18: #{tpu_custom_call.1} parent=11 // pred_check_branch
          %154 = sbr.rel (%p152) target = $region20
        $region19: #{tpu_custom_call.1} parent=11 // pred_region
          _
        $region20: #{tpu_custom_call.1} parent=11 // pred_fallthru
          _
      $region12: #{tpu_custom_call.1} parent=5 // pred_fallthru
        _
      %p155 = scmp.lt.s32.totalorder %s14, 4
      // Predicated region
      $region21: #{tpu_custom_call.1} parent=5 // pred_check
        %p156 = pneg %p155
      $region22: #{tpu_custom_call.1} parent=5 // pred_check_branch
        %158 = sbr.rel (%p156) target = $region24
      $region23: #{tpu_custom_call.1} parent=5 // pred_region
        // Predicated region
        $region25: #{tpu_custom_call.1} parent=23 // pred_check
          %p159 = pneg %p34
        $region26: #{tpu_custom_call.1} parent=23 // pred_check_branch
          %161 = sbr.rel (%p159) target = $region28
        $region27: #{tpu_custom_call.1} parent=23 // pred_region
          %s162 = smul.u32 2, %s14
          %p163 = scmp.lt.s32.totalorder %s162, 7
          %s164 = scalar_select %p163, %s162, 7
          %s165 = smul.addr %s164, 8
          %s166 = scalar_lea.vmem %s0, %s165
          %s167 = smul.u32 2, %s14
        $region28: #{tpu_custom_call.1} parent=23 // pred_fallthru
          _
      $region24: #{tpu_custom_call.1} parent=5 // pred_fallthru
        _
      %p168 = scmp.le.s32.totalorder 1, %s14
      %p169 = scmp.lt.s32.totalorder %s14, 5
      %p170 = pnand %p168, %p169
      %p171 = pneg %p170
      // Predicated region
      $region29: #{tpu_custom_call.1} parent=5 // pred_check
        _
      $region30: #{tpu_custom_call.1} parent=5 // pred_check_branch
        %173 = sbr.rel (%p170) target = $region32
      $region31: #{tpu_custom_call.1} parent=5 // pred_region
        %s174 = ssub.s32 %s14, 1
        %s175 = smul.u32 2, %s19
        %p176 = scmp.lt.s32.totalorder %s175, 7
        %s177 = scalar_select %p176, %s175, 7
        %s178 = smul.addr %s177, 8
        %s179 = scalar_lea.vmem %s0, %s178
        %p180 = pneg %p40
        %p181 = pneg %p37
        %p182 = pneg %p61
        %p183 = pneg %p58
        %p184 = pneg %p82
        %p185 = pneg %p79
        %p186 = pneg %p108
        %p187 = pneg %p105
        %s188 = smul.u32 2, %s19
        %p189 = scmp.lt.s32.totalorder %s188, 7
        %s190 = scalar_select %p189, %s188, 7
        %s191 = smul.addr %s190, 8
        %s192 = scalar_lea.vmem %s3, %s191
        %p193 = pneg %p134
        %p194 = pneg %p131
        %s195 = sand.u32 %s121, 1
        %s196 = scalar_lea.sflag [#allocation3], %s195
        %s197 = sand.u32 %s121, 1
        %s198 = smul.addr %s197, 48
        %s199 = scalar_lea.vmem [#allocation2], %s198
        %s200 = smul.u32 2, %s19
        %p201 = scmp.lt.s32.totalorder %s200, 7
        %s202 = scalar_select %p201, %s200, 7
        %s203 = smul.addr %s202, 8
        %s204 = scalar_lea.vmem %s0, %s203
        %s205 = smul.u32 2, %s19
        %s206 = smul.u32 2, %s19
        %p207 = scmp.lt.s32.totalorder %s206, 7
        %s208 = scalar_select %p207, %s206, 7
        %s209 = smul.addr %s208, 8
        %s210 = scalar_lea.vmem %s3, %s209
        %s211 = smul.u32 2, %s19
        %s212 = smul.u32 2, %s19
        %v213 = vld [vmem:[%s204] sm:$0xff]
        %v214 = vld [vmem:[%s204 + $0x8] sm:$0xff]
        %v215 = vld [vmem:[%s1] sm:$0x77]
        %v216 = vld [vmem:[%s1 + $0x8] sm:$0x7]
        %218 = vset.pattern.permute.xlu0 0
        %219 = vperm.xlu0 %218, %v213
        %v220 = vpop.permute.xlu0 %219
        %223 = vset.pattern.permute.xlu0 0
        %224 = vperm.xlu0 %223, %v214
        %v225 = vpop.permute.xlu0 %224
        %v229 = vlaneseq
        %v230 = vshrl.u32 %v229, 7
        %v231 = vsub.s32 0, %v230
        %v232 = vrot.slane %v215, %v231
        %v233 = vlaneseq
        %v234 = vshrl.u32 %v233, 7
        %v235 = vsub.s32 4, %v234
        %v236 = vrot.slane %v215, %v235
        %v237 = vlaneseq
        %v238 = vshrl.u32 %v237, 7
        %v239 = vsub.s32 0, %v238
        %v240 = vrot.slane %v216, %v239
        %v244 = vlaneseq
        %v245 = vshrl.u32 %v244, 7
        %v246 = vsub.s32 0, %v245
        %v247 = vrot.slane %v232, %v246
        %v248 = vlaneseq
        %v249 = vshrl.u32 %v248, 7
        %v250 = vsub.s32 0, %v249
        %v251 = vrot.slane %v236, %v250
        %v252 = vlaneseq
        %v253 = vshrl.u32 %v252, 7
        %v254 = vsub.s32 0, %v253
        %v255 = vrot.slane %v240, %v254
        %v256 = vsub.f32 %v220, %v247
        %v257 = vsub.f32 %v220, %v251
        %v258 = vsub.f32 %v220, %v255
        %v259 = vsub.f32 %v225, %v247
        %v260 = vsub.f32 %v225, %v251
        %v261 = vsub.f32 %v225, %v255
        %v262 = vmul.f32 %v256, %v256
        %v263 = vmul.f32 %v257, %v257
        %v264 = vmul.f32 %v258, %v258
        %v265 = vmul.f32 %v259, %v259
        %v266 = vmul.f32 %v260, %v260
        %v267 = vmul.f32 %v261, %v261
        %268 = vset.pattern.permute.xlu0 1
        %269 = vperm.xlu0 %268, %v213
        %v270 = vpop.permute.xlu0 %269
        %272 = vset.pattern.permute.xlu0 1
        %273 = vperm.xlu0 %272, %v214
        %v274 = vpop.permute.xlu0 %273
        %v276 = vlaneseq
        %v277 = vshrl.u32 %v276, 7
        %v278 = vsub.s32 1, %v277
        %v279 = vrot.slane %v215, %v278
        %v280 = vlaneseq
        %v281 = vshrl.u32 %v280, 7
        %v282 = vsub.s32 5, %v281
        %v283 = vrot.slane %v215, %v282
        %v284 = vlaneseq
        %v285 = vshrl.u32 %v284, 7
        %v286 = vsub.s32 1, %v285
        %v287 = vrot.slane %v216, %v286
        %v291 = vlaneseq
        %v292 = vshrl.u32 %v291, 7
        %v293 = vsub.s32 1, %v292
        %v294 = vrot.slane %v279, %v293
        %v295 = vlaneseq
        %v296 = vshrl.u32 %v295, 7
        %v297 = vsub.s32 1, %v296
        %v298 = vrot.slane %v283, %v297
        %v299 = vlaneseq
        %v300 = vshrl.u32 %v299, 7
        %v301 = vsub.s32 1, %v300
        %v302 = vrot.slane %v287, %v301
        %v303 = vsub.f32 %v270, %v294
        %v304 = vsub.f32 %v270, %v298
        %v305 = vsub.f32 %v270, %v302
        %v306 = vsub.f32 %v274, %v294
        %v307 = vsub.f32 %v274, %v298
        %v308 = vsub.f32 %v274, %v302
        %v309 = vmul.f32 %v303, %v303
        %v310 = vmul.f32 %v304, %v304
        %v311 = vmul.f32 %v305, %v305
        %v312 = vmul.f32 %v306, %v306
        %v313 = vmul.f32 %v307, %v307
        %v314 = vmul.f32 %v308, %v308
        %v315 = vadd.f32 %v262, %v309
        %v316 = vadd.f32 %v263, %v310
        %v317 = vadd.f32 %v264, %v311
        %v318 = vadd.f32 %v265, %v312
        %v319 = vadd.f32 %v266, %v313
        %v320 = vadd.f32 %v267, %v314
        %321 = vset.pattern.permute.xlu0 2
        %322 = vperm.xlu0 %321, %v213
        %v323 = vpop.permute.xlu0 %322
        %325 = vset.pattern.permute.xlu0 2
        %326 = vperm.xlu0 %325, %v214
        %v327 = vpop.permute.xlu0 %326
        %v329 = vlaneseq
        %v330 = vshrl.u32 %v329, 7
        %v331 = vsub.s32 2, %v330
        %v332 = vrot.slane %v215, %v331
        %v333 = vlaneseq
        %v334 = vshrl.u32 %v333, 7
        %v335 = vsub.s32 6, %v334
        %v336 = vrot.slane %v215, %v335
        %v337 = vlaneseq
        %v338 = vshrl.u32 %v337, 7
        %v339 = vsub.s32 2, %v338
        %v340 = vrot.slane %v216, %v339
        %v344 = vlaneseq
        %v345 = vshrl.u32 %v344, 7
        %v346 = vsub.s32 2, %v345
        %v347 = vrot.slane %v332, %v346
        %v348 = vlaneseq
        %v349 = vshrl.u32 %v348, 7
        %v350 = vsub.s32 2, %v349
        %v351 = vrot.slane %v336, %v350
        %v352 = vlaneseq
        %v353 = vshrl.u32 %v352, 7
        %v354 = vsub.s32 2, %v353
        %v355 = vrot.slane %v340, %v354
        %v356 = vsub.f32 %v323, %v347
        %v357 = vsub.f32 %v323, %v351
        %v358 = vsub.f32 %v323, %v355
        %v359 = vsub.f32 %v327, %v347
        %v360 = vsub.f32 %v327, %v351
        %v361 = vsub.f32 %v327, %v355
        %v362 = vmul.f32 %v356, %v356
        %v363 = vmul.f32 %v357, %v357
        %v364 = vmul.f32 %v358, %v358
        %v365 = vmul.f32 %v359, %v359
        %v366 = vmul.f32 %v360, %v360
        %v367 = vmul.f32 %v361, %v361
        %v368 = vadd.f32 %v315, %v362
        %v369 = vadd.f32 %v316, %v363
        %v370 = vadd.f32 %v317, %v364
        %v371 = vadd.f32 %v318, %v365
        %v372 = vadd.f32 %v319, %v366
        %v373 = vadd.f32 %v320, %v367
        %v374 = vlaneseq
        %v375 = vand.u32 %v374, 127
        %v376 = vadd.s32 %v375, 128
        %v377 = vadd.s32 %v375, 256
        %vm378 = vcmask 523264
        %v379 = vsel %vm378, %v370, inf
        %v380 = vmin.f32 %v368, %v379
        %v381 = vmin.f32 %v380, %v369
        %382 = vmin.xlane.f32.xlu0 %v381
        %v383 = vpop.xlane.xlu0 %382
        %v384 = vsel %vm378, %v373, inf
        %v385 = vmin.f32 %v371, %v384
        %v386 = vmin.f32 %v385, %v372
        %387 = vmin.xlane.f32.xlu0 %v386
        %v388 = vpop.xlane.xlu0 %387
        %vm389 = vcmp.eq.f32.partialorder %v368, %v383
        %vm390 = vcmp.eq.f32.partialorder %v369, %v383
        %vm391 = vcmp.eq.f32.partialorder %v370, %v383
        %vm392 = vcmp.eq.f32.partialorder %v371, %v388
        %vm393 = vcmp.eq.f32.partialorder %v372, %v388
        %vm394 = vcmp.eq.f32.partialorder %v373, %v388
        %v395 = vsel %vm389, %v375, 320
        %v396 = vsel %vm390, %v376, 320
        %v397 = vsel %vm391, %v377, 320
        %v398 = vsel %vm392, %v375, 320
        %v399 = vsel %vm393, %v376, 320
        %v400 = vsel %vm394, %v377, 320
        %v401 = vsel %vm378, %v397, 2147483647
        %vm402 = vcmp.lt.s32.totalorder %v395, %v401
        %v403 = vsel %vm402, %v395, %v401
        %vm404 = vcmp.lt.s32.totalorder %v403, %v396
        %v405 = vsel %vm404, %v403, %v396
        %v406 = vand.u32 %v405, 65535
        %v407 = vshra.s32 %v405, 16
        %v408 = vcvt.s32.f32 %v406
        %v409 = vcvt.s32.f32 %v407
        %410 = vmin.xlane.f32.xlu0 %v409
        %v411 = vpop.xlane.xlu0 %410
        %vm412 = vcmp.eq.f32.partialorder %v409, %v411
        %v413 = vsel %vm412, %v408, inf
        %414 = vmin.xlane.f32.xlu0 %v413
        %v415 = vpop.xlane.xlu0 %414
        %v416 = vcvt.f32.s32 %v415
        %v417 = vcvt.f32.s32 %v411
        %v418 = vshll.u32 %v417, 16
        %v419 = vadd.s32 %v418, %v416
        %v420 = vsel %vm378, %v400, 2147483647
        %vm421 = vcmp.lt.s32.totalorder %v398, %v420
        %v422 = vsel %vm421, %v398, %v420
        %vm423 = vcmp.lt.s32.totalorder %v422, %v399
        %v424 = vsel %vm423, %v422, %v399
        %v425 = vand.u32 %v424, 65535
        %v426 = vshra.s32 %v424, 16
        %v427 = vcvt.s32.f32 %v425
        %v428 = vcvt.s32.f32 %v426
        %429 = vmin.xlane.f32.xlu0 %v428
        %v430 = vpop.xlane.xlu0 %429
        %vm431 = vcmp.eq.f32.partialorder %v428, %v430
        %v432 = vsel %vm431, %v427, inf
        %433 = vmin.xlane.f32.xlu0 %v432
        %v434 = vpop.xlane.xlu0 %433
        %v435 = vcvt.f32.s32 %v434
        %v436 = vcvt.f32.s32 %v430
        %v437 = vshll.u32 %v436, 16
        %v438 = vadd.s32 %v437, %v435
        %vm439 = vcmp.eq.s32.totalorder %v375, %v419
        %vm440 = vcmp.eq.s32.totalorder %v376, %v419
        %vm441 = vcmp.eq.s32.totalorder %v377, %v419
        %vm442 = vcmp.eq.s32.totalorder %v375, %v438
        %vm443 = vcmp.eq.s32.totalorder %v376, %v438
        %vm444 = vcmp.eq.s32.totalorder %v377, %v438
        %v445 = vsel %vm439, 1, 0
        %v446 = vsel %vm440, 1, 0
        %v447 = vsel %vm441, 1, 0
        %v448 = vsel %vm442, 1, 0
        %v449 = vsel %vm443, 1, 0
        %v450 = vsel %vm444, 1, 0
        %v451 = vcvt.s32.f32 %v445
        %v452 = vcvt.s32.f32 %v446
        %v453 = vcvt.s32.f32 %v447
        %v454 = vcvt.s32.f32 %v448
        %v455 = vcvt.s32.f32 %v449
        %v456 = vcvt.s32.f32 %v450
        %457 = vst [vmem:[%s199] sm:$0xff] %v451
        %458 = vst [vmem:[%s199 + $0x8] sm:$0xff] %v452
        %459 = vst.msk [vmem:[%s199 + $0x10] sm:$0xff] %vm378, %v453
        %460 = vst [vmem:[%s199 + $0x18] sm:$0xff] %v454
        %461 = vst [vmem:[%s199 + $0x20] sm:$0xff] %v455
        %462 = vst.msk [vmem:[%s199 + $0x28] sm:$0xff] %vm378, %v456
        %v463 = vld [vmem:[%s2] sm:$0xff]
        %v464 = vld [vmem:[%s2 + $0x8] sm:$0xff]
        %v465 = vld [vmem:[%s2 + $0x10] sm:$0xff]
        %v466 = vld [vmem:[%s2 + $0x18] sm:$0xff]
        %v467 = vld [vmem:[%s2 + $0x20] sm:$0xff]
        %v468 = vld [vmem:[%s2 + $0x28] sm:$0xff]
        %v469 = vld [vmem:[%s2 + $0x30] sm:$0xff]
        %v470 = vld [vmem:[%s2 + $0x38] sm:$0xff]
        %v471 = vld [vmem:[%s2 + $0x40] sm:$0xff]
        %v472 = vld [vmem:[%s2 + $0x48] sm:$0xff]
        %v473 = vld [vmem:[%s2 + $0x50] sm:$0xff]
        %v474 = vld [vmem:[%s2 + $0x58] sm:$0xff]
        %v475 = vld [vmem:[%s2 + $0x60] sm:$0xff]
        %v476 = vld [vmem:[%s2 + $0x68] sm:$0xff]
        %v477 = vld [vmem:[%s2 + $0x70] sm:$0xff]
        %v478 = vld [vmem:[%s2 + $0x78] sm:$0xff]
        %v479 = vld [vmem:[%s2 + $0x80] sm:$0xff]
        %v480 = vld [vmem:[%s2 + $0x88] sm:$0xff]
        %v481 = vld [vmem:[%s2 + $0x90] sm:$0xff]
        %v482 = vld [vmem:[%s2 + $0x98] sm:$0xff]
        %v483 = vld [vmem:[%s2 + $0xa0] sm:$0xff]
        %v484 = vld [vmem:[%s2 + $0xa8] sm:$0xff]
        %v485 = vld [vmem:[%s2 + $0xb0] sm:$0xff]
        %v486 = vld [vmem:[%s2 + $0xb8] sm:$0xff]
        %v487 = vld [vmem:[%s2 + $0xc0] sm:$0xff]
        %v488 = vld [vmem:[%s2 + $0xc8] sm:$0xff]
        %v489 = vld [vmem:[%s2 + $0xd0] sm:$0xff]
        %v490 = vld [vmem:[%s2 + $0xd8] sm:$0xff]
        %v491 = vld [vmem:[%s2 + $0xe0] sm:$0xff]
        %v492 = vld [vmem:[%s2 + $0xe8] sm:$0xff]
        %v493 = vld [vmem:[%s2 + $0xf0] sm:$0xff]
        %v494 = vld [vmem:[%s2 + $0xf8] sm:$0xff]
        %v495 = vld [vmem:[%s2 + $0x100] sm:$0xff]
        %v496 = vld [vmem:[%s2 + $0x108] sm:$0xff]
        %v497 = vld [vmem:[%s2 + $0x110] sm:$0xff]
        %v498 = vld [vmem:[%s2 + $0x118] sm:$0xff]
        %v499 = vld [vmem:[%s2 + $0x120] sm:$0xff]
        %v500 = vld [vmem:[%s2 + $0x128] sm:$0xff]
        %v501 = vld [vmem:[%s2 + $0x130] sm:$0xff]
        %v502 = vld [vmem:[%s2 + $0x138] sm:$0xff]
        %v504 = vsel %vm378, %v453, 0
        %v507 = vsel %vm378, %v456, 0
        %509 = vmatprep.subr.mxu0 0.0
        %510 = vmatpush1.msra.mxu0 %v463
        %511 = vmatprep.subr.mxu0 0.0
        %512 = vmatpush1.msra.mxu0 %v464
        %513 = vmatprep.subr.mxu0 0.0
        %514 = vmatpush1.msra.mxu0 %v465
        %515 = vmatprep.subr.mxu0 0.0
        %516 = vmatpush1.msra.mxu0 %v466
        %517 = vmatprep.subr.mxu0 0.0
        %518 = vmatpush1.msra.mxu0 %v467
        %519 = vmatprep.subr.mxu0 0.0
        %520 = vmatpush1.msra.mxu0 %v468
        %521 = vmatprep.subr.mxu0 0.0
        %522 = vmatpush1.msra.mxu0 %v469
        %523 = vmatprep.subr.mxu0 0.0
        %524 = vmatpush1.msra.mxu0 %v470
        %525 = vmatprep.subr.mxu0 0.0
        %526 = vmatpush1.msra.mxu0 %v471
        %527 = vmatprep.subr.mxu0 0.0
        %528 = vmatpush1.msra.mxu0 %v472
        %529 = vmatprep.subr.mxu0 0.0
        %530 = vmatpush1.msra.mxu0 %v473
        %531 = vmatprep.subr.mxu0 0.0
        %532 = vmatpush1.msra.mxu0 %v474
        %533 = vmatprep.subr.mxu0 0.0
        %534 = vmatpush1.msra.mxu0 %v475
        %535 = vmatprep.subr.mxu0 0.0
        %536 = vmatpush1.msra.mxu0 %v476
        %537 = vmatprep.subr.mxu0 0.0
        %538 = vmatpush1.msra.mxu0 %v477
        %539 = vmatprep.subr.mxu0 0.0
        %540 = vmatpush1.msra.mxu0 %v478
        %541 = vmatprep.subr.mxu0 0.0
        %542 = vmatpush1.msra.mxu0 %v479
        %543 = vmatprep.subr.mxu0 0.0
        %544 = vmatpush1.msra.mxu0 %v480
        %545 = vmatprep.subr.mxu0 0.0
        %546 = vmatpush1.msra.mxu0 %v481
        %547 = vmatprep.subr.mxu0 0.0
        %548 = vmatpush1.msra.mxu0 %v482
        %549 = vmatprep.subr.mxu0 0.0
        %550 = vmatpush1.msra.mxu0 %v483
        %551 = vmatprep.subr.mxu0 0.0
        %552 = vmatpush1.msra.mxu0 %v484
        %553 = vmatprep.subr.mxu0 0.0
        %554 = vmatpush1.msra.mxu0 %v485
        %555 = vmatprep.subr.mxu0 0.0
        %556 = vmatpush1.msra.mxu0 %v486
        %557 = vmatprep.subr.mxu0 0.0
        %558 = vmatpush1.msra.mxu0 %v487
        %559 = vmatprep.subr.mxu0 0.0
        %560 = vmatpush1.msra.mxu0 %v488
        %561 = vmatprep.subr.mxu0 0.0
        %562 = vmatpush1.msra.mxu0 %v489
        %563 = vmatprep.subr.mxu0 0.0
        %564 = vmatpush1.msra.mxu0 %v490
        %565 = vmatprep.subr.mxu0 0.0
        %566 = vmatpush1.msra.mxu0 %v491
        %567 = vmatprep.subr.mxu0 0.0
        %568 = vmatpush1.msra.mxu0 %v492
        %569 = vmatprep.subr.mxu0 0.0
        %570 = vmatpush1.msra.mxu0 %v493
        %571 = vmatprep.subr.mxu0 0.0
        %572 = vmatpush1.msra.mxu0 %v494
        %573 = vmatprep.mubr.f32.mxu0 %v452
        %574 = vmatmul.mubr.f32.gmra.mrb[0].mxu0 %v451
        %v575 = vpop.f32.mrb[0].mxu0
        %v576 = vadd.f32 0.0, %v575
        %v577 = vpop.f32.mrb[0].mxu0
        %578 = vmatprep.mubr.f32.mxu0 %v455
        %579 = vmatmul.mubr.f32.gmra.mrb[0].mxu0 %v454
        %v580 = vpop.f32.mrb[0].mxu0
        %v581 = vadd.f32 0.0, %v580
        %v582 = vpop.f32.mrb[0].mxu0
        %583 = vdwg.mxu0
        %584 = vmatprep.subr.mxu0 0.0
        %585 = vmatpush1.msra.mxu0 %v495
        %586 = vmatprep.subr.mxu0 0.0
        %587 = vmatpush1.msra.mxu0 %v496
        %588 = vmatprep.subr.mxu0 0.0
        %589 = vmatpush1.msra.mxu0 %v497
        %590 = vmatprep.subr.mxu0 0.0
        %591 = vmatpush1.msra.mxu0 %v498
        %592 = vmatprep.subr.mxu0 0.0
        %593 = vmatpush1.msra.mxu0 %v499
        %594 = vmatprep.subr.mxu0 0.0
        %595 = vmatpush1.msra.mxu0 %v500
        %596 = vmatprep.subr.mxu0 0.0
        %597 = vmatpush1.msra.mxu0 %v501
        %598 = vmatprep.subr.mxu0 0.0
        %599 = vmatpush1.msra.mxu0 %v502
        %600 = vmatprep.subr.mxu0 0.0
        %601 = vmatpush1.msra.mxu0 0.0
        %602 = vmatprep.subr.mxu0 0.0
        %603 = vmatpush1.msra.mxu0 0.0
        %604 = vmatprep.subr.mxu0 0.0
        %605 = vmatpush1.msra.mxu0 0.0
        %606 = vmatprep.subr.mxu0 0.0
        %607 = vmatpush1.msra.mxu0 0.0
        %608 = vmatprep.subr.mxu0 0.0
        %609 = vmatpush1.msra.mxu0 0.0
        %610 = vmatprep.subr.mxu0 0.0
        %611 = vmatpush1.msra.mxu0 0.0
        %612 = vmatprep.subr.mxu0 0.0
        %613 = vmatpush1.msra.mxu0 0.0
        %614 = vmatprep.subr.mxu0 0.0
        %615 = vmatpush1.msra.mxu0 0.0
        %616 = vmatprep.subr.mxu0 0.0
        %617 = vmatpush1.msra.mxu0 0.0
        %618 = vmatprep.subr.mxu0 0.0
        %619 = vmatpush1.msra.mxu0 0.0
        %620 = vmatprep.subr.mxu0 0.0
        %621 = vmatpush1.msra.mxu0 0.0
        %622 = vmatprep.subr.mxu0 0.0
        %623 = vmatpush1.msra.mxu0 0.0
        %624 = vmatprep.subr.mxu0 0.0
        %625 = vmatpush1.msra.mxu0 0.0
        %626 = vmatprep.subr.mxu0 0.0
        %627 = vmatpush1.msra.mxu0 0.0
        %628 = vmatprep.subr.mxu0 0.0
        %629 = vmatpush1.msra.mxu0 0.0
        %630 = vmatprep.subr.mxu0 0.0
        %631 = vmatpush1.msra.mxu0 0.0
        %632 = vmatprep.subr.mxu0 0.0
        %633 = vmatpush1.msra.mxu0 0.0
        %634 = vmatprep.subr.mxu0 0.0
        %635 = vmatpush1.msra.mxu0 0.0
        %636 = vmatprep.subr.mxu0 0.0
        %637 = vmatpush1.msra.mxu0 0.0
        %638 = vmatprep.subr.mxu0 0.0
        %639 = vmatpush1.msra.mxu0 0.0
        %640 = vmatprep.subr.mxu0 0.0
        %641 = vmatpush1.msra.mxu0 0.0
        %642 = vmatprep.subr.mxu0 0.0
        %643 = vmatpush1.msra.mxu0 0.0
        %644 = vmatprep.subr.mxu0 0.0
        %645 = vmatpush1.msra.mxu0 0.0
        %646 = vmatprep.subr.mxu0 0.0
        %647 = vmatpush1.msra.mxu0 0.0
        %648 = vmatprep.mubr.f32.mxu0 0.0
        %649 = vmatmul.mubr.f32.gmra.mrb[0].mxu0 %v504
        %v650 = vpop.f32.mrb[0].mxu0
        %v651 = vadd.f32 %v576, %v650
        %v652 = vpop.f32.mrb[0].mxu0
        %653 = vmatprep.mubr.f32.mxu0 0.0
        %654 = vmatmul.mubr.f32.gmra.mrb[0].mxu0 %v507
        %v655 = vpop.f32.mrb[0].mxu0
        %v656 = vadd.f32 %v581, %v655
        %v657 = vpop.f32.mrb[0].mxu0
        %658 = vdwg.mxu0
        %vm659 = vcmask 23552
        %660 = vst.msk [vmem:[%s210] sm:$0xff] %vm659, %v651
        %661 = vst.msk [vmem:[%s210 + $0x8] sm:$0xff] %vm659, %v656
        %s662 = smul.u32 2, %s19
        %p663 = scmp.lt.s32.totalorder %s662, 7
        %s664 = scalar_select %p663, %s662, 7
        %s665 = smul.addr %s664, 8
        %s666 = scalar_lea.vmem %s3, %s665
        %s667 = sand.u32 %s121, 1
        %s668 = scalar_lea.sflag [#allocation3], %s667
        %s669 = sand.u32 %s121, 1
        %s670 = smul.addr %s669, 48
        %s671 = scalar_lea.vmem [#allocation2], %s670
        // Predicated region
        $region33: #{tpu_custom_call.1} parent=31 // pred_check
          %p672 = pneg %p105
        $region34: #{tpu_custom_call.1} parent=31 // pred_check_branch
          %674 = sbr.rel (%p672) target = $region36
        $region35: #{tpu_custom_call.1} parent=31 // pred_region
          %s675 = smul.u32 2, %s19
        $region36: #{tpu_custom_call.1} parent=31 // pred_fallthru
          _
        // Predicated region
        $region37: #{tpu_custom_call.1} parent=31 // pred_check
          %p676 = pneg %p131
        $region38: #{tpu_custom_call.1} parent=31 // pred_check_branch
          %678 = sbr.rel (%p676) target = $region40
        $region39: #{tpu_custom_call.1} parent=31 // pred_region
          %s679 = smul.u32 2, %s19
          %s681 = ssub.s32 768, 768
          %682 = vsyncadd %s668, %s681
          %s683 = smul.addr %s679, 3
          %s684 = smul.addr %s683, 128
          %s685 = scalar_lea.hbm %s4, %s684
          %s686 = sshll.u32 %s671, 4
          %s687 = int_to_ptr.vmem [resolvable:$true] %s686
          %692 = dma.vmem_to_hbm [thread:$0]  %s687, 768, %s685, %s668, 384, 384, 24
        $region40: #{tpu_custom_call.1} parent=31 // pred_fallthru
          _
      $region32: #{tpu_custom_call.1} parent=5 // pred_fallthru
        _
      %p693 = scmp.le.s32.totalorder 2, %s14
      // Predicated region
      $region41: #{tpu_custom_call.1} parent=5 // pred_check
        %p694 = pneg %p693
      $region42: #{tpu_custom_call.1} parent=5 // pred_check_branch
        %696 = sbr.rel (%p694) target = $region44
      $region43: #{tpu_custom_call.1} parent=5 // pred_region
        %s697 = ssub.s32 %s14, 2
        // Predicated region
        $region45: #{tpu_custom_call.1} parent=43 // pred_check
          %p698 = pneg %p111
        $region46: #{tpu_custom_call.1} parent=43 // pred_check_branch
          %700 = sbr.rel (%p698) target = $region48
        $region47: #{tpu_custom_call.1} parent=43 // pred_region
          %s701 = smul.u32 2, %s20
          %p702 = scmp.lt.s32.totalorder %s701, 7
          %s703 = scalar_select %p702, %s701, 7
          %s704 = smul.addr %s703, 8
          %s705 = scalar_lea.vmem %s3, %s704
        $region48: #{tpu_custom_call.1} parent=43 // pred_fallthru
          _
        // Predicated region
        $region49: #{tpu_custom_call.1} parent=43 // pred_check
          %p706 = pneg %p137
        $region50: #{tpu_custom_call.1} parent=43 // pred_check_branch
          %708 = sbr.rel (%p706) target = $region52
        $region51: #{tpu_custom_call.1} parent=43 // pred_region
          %s709 = sand.u32 %s122, 1
          %s710 = scalar_lea.sflag [#allocation3], %s709
          %s711 = sand.u32 %s122, 1
          %s712 = smul.addr %s711, 48
          %s713 = scalar_lea.vmem [#allocation2], %s712
          %714 = dma.done %s710, 768
        $region52: #{tpu_custom_call.1} parent=43 // pred_fallthru
          _
      $region44: #{tpu_custom_call.1} parent=5 // pred_fallthru
        _
    $region6: #{tpu_custom_call.1} parent=1 // loop_footer
      %s18 = sadd.s32 1, %s14
    $region7: #{tpu_custom_call.1} parent=1 // loop_footer_branch
      %13 = sbr.rel target = $region3
    $region8: #{tpu_custom_call.1} parent=1 // loop_exit
      _
    %715 = vsyncpa [#allocation3], 1
    %s716 = scalar_lea.sflag [#allocation3], 1
    %717 = vsyncpa %s716, 1

</llo_original>
